<compile_context>
chip_gen: v7x
topology: tpu7x:2x2x1
jax: 0.10.0
libtpu: 0.0.40
codegen_flags: <defaults>
</compile_context>

<pallas_src>
import functools
import math

import jax
import jax.numpy as jnp
from jax.experimental import pallas as pl
from jax.experimental.pallas import tpu as pltpu


# ---------------------------------------------------------------------------
# Kernel
# ---------------------------------------------------------------------------
def summer_kernel(*refs, num_head, num_anchor, hsize, seql, tb, fuse_kv,
                  mxu_dtype, flat_out, approx_recip):
    """One batch-block (tb batch elements) per grid step.

    refs (fused KV):     x, a_t, hmask, wkv, wo, bo, out
    refs (split KV):     x, a_t, hmask, wk, wv, wo, bo, out

    x:     (tb, seql, isize)
    a_t:   (hsize, nh*na)   block-diagonal anchors, pre-scaled by 1/sqrt(adim),
                            transposed (head h occupies rows [h*adim,(h+1)*adim))
    hmask: (nh, hsize)      f32 0/1 head-column mask (block-diag select)
    wkv:   (isize, 2*hsize) or wk/wv: (isize, hsize) each
    wo:    (hsize, osize)   bo: (1, osize)   (V-bias already folded in)
    out:   (tb, na*osize) if flat_out else (tb, na, osize)
    """
    if fuse_kv:
        x_ref, a_t_ref, hmask_ref, wkv_ref, wo_ref, bo_ref, o_ref = refs
    else:
        x_ref, a_t_ref, hmask_ref, wk_ref, wv_ref, wo_ref, bo_ref, o_ref = refs

    f32 = jnp.float32
    cdt = x_ref.dtype if mxu_dtype is None else mxu_dtype   # MXU operand dtype
    isize = x_ref.shape[-1]
    osize = wo_ref.shape[-1]
    M = num_head * num_anchor
    rows = tb * seql

    # ---- K/V projection: tall matmul(s) on the MXU (no biases here) -------
    xf = x_ref[...].reshape(rows, isize).astype(cdt)          # in-kernel cast
    if fuse_kv:
        kv = jnp.dot(xf, wkv_ref[...], preferred_element_type=f32)
        k = kv[:, :hsize].astype(cdt)      # lane-tile aligned (hsize % 128 == 0)
        v = kv[:, hsize:].astype(cdt)
    else:
        k = jnp.dot(xf, wk_ref[...], preferred_element_type=f32).astype(cdt)
        v = jnp.dot(xf, wv_ref[...], preferred_element_type=f32).astype(cdt)

    # ---- scores for ALL heads: one tall matmul, then per-batch XLU
    #      transpose so the softmax reduce runs on the lane (seql) axis.
    s_rows = jnp.dot(k, a_t_ref[...], preferred_element_type=f32)   # (rows, M)
    s = jnp.swapaxes(s_rows.reshape(tb, seql, M), -1, -2)           # (tb, M, seql)

    # ---- softmax over the sequence (lane) axis ------------------------------
    m = jnp.max(s, axis=-1, keepdims=True)
    e = jnp.exp(s - m)
    den = jnp.sum(e, axis=-1, keepdims=True)
    if approx_recip:
        p = e * pl.reciprocal(den, approx=True)
    else:
        p = e / den

    # ---- context for all heads, then block-diagonal head selection ----------
    ctx_full = jnp.einsum('bms,bsh->bmh', p.astype(cdt),
                          v.reshape(tb, seql, hsize),
                          preferred_element_type=f32)                # (tb, M, hsize)
    ctx = jnp.sum(
        ctx_full.reshape(tb, num_head, num_anchor, hsize)
        * hmask_ref[...][None, :, None, :],
        axis=1)                                                      # (tb, na, hsize)

    # ---- output projection (V bias folded into bo by the wrapper) -----------
    out = jnp.dot(ctx.reshape(tb * num_anchor, hsize).astype(cdt), wo_ref[...],
                  preferred_element_type=f32) + bo_ref[...]          # (tb*na, osize)
    if flat_out:
        o_ref[...] = out.reshape(tb, num_anchor * osize).astype(o_ref.dtype)
    else:
        o_ref[...] = out.reshape(tb, num_anchor, osize).astype(o_ref.dtype)


# ---------------------------------------------------------------------------
# Tiling / VMEM budgeting helpers
# ---------------------------------------------------------------------------
def _round_up(x, m):
    return ((x + m - 1) // m) * m


def _vmem_capacity_bytes():
    try:
        info = pltpu.get_tpu_info()
        cap = getattr(info, "vmem_capacity_bytes", None)
        if cap:
            return int(cap)
    except Exception:
        pass
    return 64 * 1024 * 1024   # conservative (v7x-sized) fallback


def _estimate_vmem_bytes(tb, *, seql, isize, hsize, osize, num_head,
                         num_anchor, x_bytes, c_bytes):
    """Rough VMEM footprint of one grid step (lane/sublane padding included)."""
    f32 = 4
    L = 128
    M = num_head * num_anchor
    rows = tb * seql
    # double-buffered x input block (isize < 128 pads to a full lane tile)
    x_blk = 2 * tb * _round_up(seql, 8) * _round_up(isize, L) * x_bytes
    # double-buffered output block
    out_blk = 2 * _round_up(tb * num_anchor, 8) * _round_up(osize, L) * f32
    # K/V projections (f32 accumulator + compute-dtype copy)
    kv = 2 * _round_up(rows, 8) * _round_up(hsize, L) * (f32 + c_bytes)
    # scores / exp / probs (+ transposed copy)
    sc = 4 * tb * _round_up(M, 8) * _round_up(seql, L) * f32
    # per-head context + selected context
    ctx = tb * _round_up(M, 8) * _round_up(hsize, L) * (f32 + c_bytes)
    # weights / anchors / masks / bias (double-buffered, small)
    w = 2 * c_bytes * (
        _round_up(isize, 8) * 2 * _round_up(hsize, L)
        + _round_up(hsize, 8) * _round_up(osize, L)
        + _round_up(hsize, 8) * _round_up(M, L)
        + _round_up(num_head, 8) * _round_up(hsize, L))
    misc = 2 * 1024 * 1024
    return x_blk + out_blk + kv + sc + ctx + w + misc


def _pick_block_batch(bsize, seql, fits, min_steps, target_rows=1024):
    """Largest divisor tb of bsize with tb*seql <~ target_rows, fitting the
    VMEM budget, and (on dual-TC parts) keeping >= min_steps grid steps."""
    cap_rows = max(target_rows, seql)
    best = 1
    for tb in range(1, bsize + 1):
        if bsize % tb:
            continue
        if tb * seql > cap_rows:
            break
        if min_steps > 1 and tb > 1 and (bsize // tb) < min_steps:
            continue
        if not fits(tb):
            continue
        best = tb
    return best


# ---------------------------------------------------------------------------
# Wrapper
# ---------------------------------------------------------------------------
def summer_pallas(x, wkv, bkv, anchors, wo, bo, *, num_head, mxu_dtype=None,
                  approx_recip=True):
    """x: (b, s, isize); wkv: (isize, 2*hsize); bkv: (2*hsize,);
    anchors: (nh, na, adim); wo: (hsize, osize); bo: (osize,)."""
    bsize, seql, isize = x.shape
    hsize = wkv.shape[1] // 2
    attn_dim = hsize // num_head
    assert attn_dim * num_head == hsize
    num_anchor = anchors.shape[1]
    osize = wo.shape[1]
    M = num_head * num_anchor

    f32 = jnp.float32
    cdt = x.dtype if mxu_dtype is None else mxu_dtype

    # ---- one-time (tiny) parameter preprocessing in the wrapper ------------
    eye = jnp.eye(num_head, dtype=f32)
    scale = 1.0 / math.sqrt(attn_dim)
    # block-diagonal anchors, pre-scaled, transposed to (hsize, M) so the
    # in-kernel scores matmul is a single tall matmul.
    a_bd = jnp.einsum('hna,hg->hnga', anchors.astype(f32) * scale, eye)
    a_t = jnp.transpose(a_bd.reshape(M, hsize)).astype(cdt)       # (hsize, M)
    hmask = jnp.repeat(eye, attn_dim, axis=1)                     # (nh, hsize)
    # K-bias is softmax-invariant -> dropped. V-bias commutes with the
    # row-stochastic attention -> folded into the output bias.
    bv = bkv[hsize:].astype(f32)
    bo_eff = (bv @ wo.astype(f32) + bo.astype(f32)).reshape(1, osize)
    wo_c = wo.astype(cdt)

    fuse_kv = (hsize % 128 == 0)   # fused split is lane-tile aligned only then
    if fuse_kv:
        w_args = (wkv.astype(cdt),)
        w_specs = [pl.BlockSpec((isize, 2 * hsize), lambda b: (0, 0))]
    else:
        w_args = (wkv[:, :hsize].astype(cdt), wkv[:, hsize:].astype(cdt))
        w_specs = [pl.BlockSpec((isize, hsize), lambda b: (0, 0)),
                   pl.BlockSpec((isize, hsize), lambda b: (0, 0))]

    # ---- per-generation VMEM budget / grid-step policy ---------------------
    capacity = _vmem_capacity_bytes()
    small_vmem = capacity <= 64 * 1024 * 1024            # v7x-class part
    vmem_limit = (52 if small_vmem else 100) * 1024 * 1024
    budget = vmem_limit - 8 * 1024 * 1024
    min_steps = 4 if small_vmem else 1   # keep both v7x TCs fed & double-buffered

    c_bytes = jnp.dtype(cdt).itemsize
    x_bytes = jnp.dtype(x.dtype).itemsize

    def fits(tb):
        return _estimate_vmem_bytes(
            tb, seql=seql, isize=isize, hsize=hsize, osize=osize,
            num_head=num_head, num_anchor=num_anchor,
            x_bytes=x_bytes, c_bytes=c_bytes) <= budget

    tb = _pick_block_batch(bsize, seql, fits, min_steps)
    grid = (bsize // tb,)

    # lane-dense flattened output when layout rules allow it
    flat_out = ((num_anchor * osize) % 128 == 0) and (tb % 8 == 0 or tb == bsize)
    if flat_out:
        out_shape = jax.ShapeDtypeStruct((bsize, num_anchor * osize), x.dtype)
        out_spec = pl.BlockSpec((tb, num_anchor * osize), lambda b: (b, 0))
    else:
        out_shape = jax.ShapeDtypeStruct((bsize, num_anchor, osize), x.dtype)
        out_spec = pl.BlockSpec((tb, num_anchor, osize), lambda b: (b, 0, 0))

    kernel = functools.partial(
        summer_kernel, num_head=num_head, num_anchor=num_anchor, hsize=hsize,
        seql=seql, tb=tb, fuse_kv=fuse_kv, mxu_dtype=mxu_dtype,
        flat_out=flat_out, approx_recip=approx_recip)

    # TODO(synk): attention mask, dropout and SparseNormer branches are
    # config-off in the module defaults and not implemented here.
    # TODO(synk): for very large seql add a trailing "arbitrary" sequence grid
    # axis with an online-softmax accumulator (needed earlier on v7x 64 MiB).
    # TODO(synk): optionally pack x lane-dense in the wrapper when isize << 128
    # if profiles show the lane-sparse x DMA dominating.
    out = pl.pallas_call(
        kernel,
        out_shape=out_shape,
        grid_spec=pltpu.PrefetchScalarGridSpec(
            num_scalar_prefetch=0,
            grid=grid,
            in_specs=[pl.BlockSpec((tb, seql, isize), lambda b: (b, 0, 0)),
                      pl.BlockSpec((hsize, M), lambda b: (0, 0)),
                      pl.BlockSpec((num_head, hsize), lambda b: (0, 0))]
                     + w_specs
                     + [pl.BlockSpec((hsize, osize), lambda b: (0, 0)),
                        pl.BlockSpec((1, osize), lambda b: (0, 0))],
            out_specs=out_spec,
        ),
        compiler_params=pltpu.CompilerParams(
            dimension_semantics=("parallel",),
            vmem_limit_bytes=vmem_limit),
    )(x, a_t, hmask, *w_args, wo_c, bo_eff)

    if flat_out:
        out = out.reshape(bsize, num_anchor, osize)
    return out


# ---------------------------------------------------------------------------
# Pure-JAX reference mirroring the PyTorch forward
# ---------------------------------------------------------------------------
def summer_ref(x, wkv, bkv, anchors, wo, bo, *, num_head):
    b, s, _ = x.shape
    hsize = wkv.shape[1] // 2
    adim = hsize // num_head
    kv = (x @ wkv + bkv).reshape(b, s, 2, num_head, adim)
    k, v = kv[:, :, 0], kv[:, :, 1]                 # (b, s, nh, adim)
    k = jnp.transpose(k, (0, 2, 3, 1))              # (b, nh, adim, s)
    v = jnp.transpose(v, (0, 2, 1, 3))              # (b, nh, s, adim)
    scores = jnp.einsum('hna,bhas->bhns', anchors, k) / math.sqrt(adim)
    p = jax.nn.softmax(scores, axis=-1)
    ctx = jnp.einsum('bhns,bhsa->bhna', p, v)       # (b, nh, na, adim)
    ctx = jnp.transpose(ctx, (0, 2, 1, 3)).reshape(b, -1, hsize)
    return ctx @ wo + bo


def _make_inputs(keys, bsize, seql, isize, hsize, osize, num_head):
    attn_dim = hsize // num_head
    num_anchor = attn_dim            # module default: num_anchor = attn_dim
    k_x, k_anc, k_wkv, k_bkv, k_wo, k_bo = keys
    x = jax.random.normal(k_x, (bsize, seql, isize), dtype=jnp.float32)
    lim = math.sqrt(1.0 / attn_dim)
    anchors = jax.random.uniform(k_anc, (num_head, num_anchor, attn_dim),
                                 minval=-lim, maxval=lim, dtype=jnp.float32)
    wkv = jax.random.normal(k_wkv, (isize, 2 * hsize), dtype=jnp.float32) * 0.05
    bkv = jax.random.normal(k_bkv, (2 * hsize,), dtype=jnp.float32) * 0.05
    wo = jax.random.normal(k_wo, (hsize, osize), dtype=jnp.float32) * 0.05
    bo = jax.random.normal(k_bo, (osize,), dtype=jnp.float32) * 0.05
    return x, anchors, wkv, bkv, wo, bo, num_anchor


if __name__ == "__main__":
    bsize, seql = 2, 8
    isize, osize = 16, 32
    num_head = 8

    keys = jax.random.split(jax.random.PRNGKey(0), 12)

    # --- config 1: hsize=64 (split-weight KV path, adim=na=8) ---------------
    hsize = 64
    x, anchors, wkv, bkv, wo, bo, num_anchor = _make_inputs(
        keys[:6], bsize, seql, isize, hsize, osize, num_head)
    ref = summer_ref(x, wkv, bkv, anchors, wo, bo, num_head=num_head)

    out = summer_pallas(x, wkv, bkv, anchors, wo, bo, num_head=num_head)
    out = jax.block_until_ready(out)
    assert out.shape == (bsize, num_anchor, osize)
    assert jnp.allclose(out, ref, atol=1e-3, rtol=1e-3), \
        f"f32 max err {jnp.max(jnp.abs(out - ref))}"

    # bf16 MXU operands with f32 accumulation (x stays f32, cast in-kernel).
    out_bf16 = summer_pallas(x, wkv, bkv, anchors, wo, bo, num_head=num_head,
                             mxu_dtype=jnp.bfloat16)
    out_bf16 = jax.block_until_ready(out_bf16)
    assert jnp.allclose(out_bf16, ref, atol=3e-2, rtol=3e-2), \
        f"bf16 max err {jnp.max(jnp.abs(out_bf16 - ref))}"

    # --- config 2: hsize=128 exercises the fused single-matmul KV path ------
    hsize2 = 128
    x2, anchors2, wkv2, bkv2, wo2, bo2, num_anchor2 = _make_inputs(
        keys[6:12], bsize, seql, isize, hsize2, osize, num_head)
    ref2 = summer_ref(x2, wkv2, bkv2, anchors2, wo2, bo2, num_head=num_head)
    out2 = summer_pallas(x2, wkv2, bkv2, anchors2, wo2, bo2, num_head=num_head)
    out2 = jax.block_until_ready(out2)
    assert out2.shape == (bsize, num_anchor2, osize)
    assert jnp.allclose(out2, ref2, atol=1e-3, rtol=1e-3), \
        f"fused f32 max err {jnp.max(jnp.abs(out2 - ref2))}"

    print("KERNEL_OK")
</pallas_src>

<mosaic_0001>
module attributes {stable_mosaic.version = 11 : i64} {
  func.func @summer_kernel(%arg0: i32, %arg1: memref<1x8x16xf32, #tpu.memory_space<vmem>>, %arg2: memref<64x64xf32, #tpu.memory_space<vmem>>, %arg3: memref<8x64xf32, #tpu.memory_space<vmem>>, %arg4: memref<16x64xf32, #tpu.memory_space<vmem>>, %arg5: memref<16x64xf32, #tpu.memory_space<vmem>>, %arg6: memref<64x32xf32, #tpu.memory_space<vmem>>, %arg7: memref<1x32xf32, #tpu.memory_space<vmem>>, %arg8: memref<1x8x32xf32, #tpu.memory_space<vmem>>) attributes {dimension_semantics = [#tpu.dimension_semantics<parallel>], iteration_bounds = array<i64: 2>, scalar_prefetch = 0 : i64, scratch_operands = 0 : i64, tpu.core_type = #tpu.core_type<tc>, window_params = [{transform_indices = @transform_0, window_bounds = array<i64: 1, 8, 16>}, {pipeline_mode = #tpu.pipeline_mode<synchronous>, transform_indices = @transform_1, window_bounds = array<i64: 64, 64>}, {pipeline_mode = #tpu.pipeline_mode<synchronous>, transform_indices = @transform_2, window_bounds = array<i64: 8, 64>}, {pipeline_mode = #tpu.pipeline_mode<synchronous>, transform_indices = @transform_3, window_bounds = array<i64: 16, 64>}, {pipeline_mode = #tpu.pipeline_mode<synchronous>, transform_indices = @transform_4, window_bounds = array<i64: 16, 64>}, {pipeline_mode = #tpu.pipeline_mode<synchronous>, transform_indices = @transform_5, window_bounds = array<i64: 64, 32>}, {pipeline_mode = #tpu.pipeline_mode<synchronous>, transform_indices = @transform_6, window_bounds = array<i64: 1, 32>}, {transform_indices = @transform_7, window_bounds = array<i64: 1, 8, 32>}]} {
    %c0 = arith.constant 0 : index
    %c0_0 = arith.constant 0 : index
    %c0_1 = arith.constant 0 : index
    %0 = vector.load %arg1[%c0, %c0_0, %c0_1] : memref<1x8x16xf32, #tpu.memory_space<vmem>>, vector<1x8x16xf32>
    %1 = vector.shape_cast %0 : vector<1x8x16xf32> to vector<8x16xf32>
    %c0_2 = arith.constant 0 : index
    %c0_3 = arith.constant 0 : index
    %2 = vector.load %arg4[%c0_2, %c0_3] : memref<16x64xf32, #tpu.memory_space<vmem>>, vector<16x64xf32>
    %cst = arith.constant dense<0.000000e+00> : vector<8x64xf32>
    %3 = tpu.matmul %1, %2, %cst {dimension_numbers = #tpu.dot_dimension_numbers<[1], [0], [0], [1], [0, 0, 1, 1], [], []>} : vector<8x16xf32>, vector<16x64xf32>, vector<8x64xf32> -> vector<8x64xf32>
    %c0_4 = arith.constant 0 : index
    %c0_5 = arith.constant 0 : index
    %4 = vector.load %arg5[%c0_4, %c0_5] : memref<16x64xf32, #tpu.memory_space<vmem>>, vector<16x64xf32>
    %cst_6 = arith.constant dense<0.000000e+00> : vector<8x64xf32>
    %5 = tpu.matmul %1, %4, %cst_6 {dimension_numbers = #tpu.dot_dimension_numbers<[1], [0], [0], [1], [0, 0, 1, 1], [], []>} : vector<8x16xf32>, vector<16x64xf32>, vector<8x64xf32> -> vector<8x64xf32>
    %c0_7 = arith.constant 0 : index
    %c0_8 = arith.constant 0 : index
    %6 = vector.load %arg2[%c0_7, %c0_8] : memref<64x64xf32, #tpu.memory_space<vmem>>, vector<64x64xf32>
    %cst_9 = arith.constant dense<0.000000e+00> : vector<8x64xf32>
    %7 = tpu.matmul %3, %6, %cst_9 {dimension_numbers = #tpu.dot_dimension_numbers<[1], [0], [0], [1], [0, 0, 1, 1], [], []>} : vector<8x64xf32>, vector<64x64xf32>, vector<8x64xf32> -> vector<8x64xf32>
    %8 = vector.shape_cast %7 : vector<8x64xf32> to vector<1x8x64xf32>
    %9 = tpu.transpose %8, [0, 2, 1] : vector<1x8x64xf32> -> vector<1x64x8xf32>
    %cst_10 = arith.constant dense<0xFF800000> : vector<1x64xf32>
    %10 = vector.multi_reduction <maximumf>, %9, %cst_10 [2] : vector<1x64x8xf32> to vector<1x64xf32>
    %11 = vector.shape_cast %10 : vector<1x64xf32> to vector<1x64x1xf32>
    %12 = vector.broadcast %11 : vector<1x64x1xf32> to vector<1x64x8xf32>
    %13 = arith.subf %9, %12 : vector<1x64x8xf32>
    %14 = math.exp %13 : vector<1x64x8xf32>
    %cst_11 = arith.constant dense<0.000000e+00> : vector<1x64xf32>
    %15 = vector.multi_reduction <add>, %14, %cst_11 [2] : vector<1x64x8xf32> to vector<1x64xf32>
    %16 = vector.shape_cast %15 : vector<1x64xf32> to vector<1x64x1xf32>
    %17 = tpu.reciprocal %16 {approx = true} : vector<1x64x1xf32> -> vector<1x64x1xf32>
    %18 = vector.broadcast %17 : vector<1x64x1xf32> to vector<1x64x8xf32>
    %19 = arith.mulf %14, %18 : vector<1x64x8xf32>
    %20 = vector.shape_cast %5 : vector<8x64xf32> to vector<1x8x64xf32>
    "tpu.trace_start"() <{level = 10 : i32, message = "bms,bsh->bmh"}> : () -> ()
    %cst_12 = arith.constant dense<0.000000e+00> : vector<1x64x64xf32>
    %21 = tpu.matmul %19, %20, %cst_12 {dimension_numbers = #tpu.dot_dimension_numbers<[2], [1], [1], [2], [0, 0, 0, 1, 1, 2], [0], [0]>} : vector<1x64x8xf32>, vector<1x8x64xf32>, vector<1x64x64xf32> -> vector<1x64x64xf32>
    "tpu.trace_stop"() : () -> ()
    %22 = vector.shape_cast %21 : vector<1x64x64xf32> to vector<1x8x8x64xf32>
    %c0_13 = arith.constant 0 : index
    %c0_14 = arith.constant 0 : index
    %23 = vector.load %arg3[%c0_13, %c0_14] : memref<8x64xf32, #tpu.memory_space<vmem>>, vector<8x64xf32>
    %24 = vector.shape_cast %23 : vector<8x64xf32> to vector<1x8x1x64xf32>
    %25 = vector.broadcast %24 : vector<1x8x1x64xf32> to vector<1x8x8x64xf32>
    %26 = arith.mulf %22, %25 : vector<1x8x8x64xf32>
    %cst_15 = arith.constant dense<0.000000e+00> : vector<1x8x64xf32>
    %27 = vector.multi_reduction <add>, %26, %cst_15 [1] : vector<1x8x8x64xf32> to vector<1x8x64xf32>
    %28 = vector.shape_cast %27 : vector<1x8x64xf32> to vector<8x64xf32>
    %c0_16 = arith.constant 0 : index
    %c0_17 = arith.constant 0 : index
    %29 = vector.load %arg6[%c0_16, %c0_17] : memref<64x32xf32, #tpu.memory_space<vmem>>, vector<64x32xf32>
    %cst_18 = arith.constant dense<0.000000e+00> : vector<8x32xf32>
    %30 = tpu.matmul %28, %29, %cst_18 {dimension_numbers = #tpu.dot_dimension_numbers<[1], [0], [0], [1], [0, 0, 1, 1], [], []>} : vector<8x64xf32>, vector<64x32xf32>, vector<8x32xf32> -> vector<8x32xf32>
    %c0_19 = arith.constant 0 : index
    %c0_20 = arith.constant 0 : index
    %31 = vector.load %arg7[%c0_19, %c0_20] : memref<1x32xf32, #tpu.memory_space<vmem>>, vector<1x32xf32>
    %32 = vector.broadcast %31 : vector<1x32xf32> to vector<8x32xf32>
    %33 = arith.addf %30, %32 : vector<8x32xf32>
    %34 = vector.shape_cast %33 : vector<8x32xf32> to vector<1x8x32xf32>
    %c0_21 = arith.constant 0 : index
    %c0_22 = arith.constant 0 : index
    %c0_23 = arith.constant 0 : index
    %35 = vector.load %arg8[%c0_21, %c0_22, %c0_23] : memref<1x8x32xf32, #tpu.memory_space<vmem>>, vector<1x8x32xf32>
    tpu.vector_store %arg8[%c0_21, %c0_22, %c0_23], %34 {strides = array<i32>} : memref<1x8x32xf32, #tpu.memory_space<vmem>>, vector<1x8x32xf32>,
    return
  }
  func.func @transform_0(%arg0: i32) -> (i32, i32, i32) {
    %c0_i32 = arith.constant 0 : i32
    %c0_i32_0 = arith.constant 0 : i32
    %c0_i32_1 = arith.constant 0 : i32
    return %arg0, %c0_i32, %c0_i32_0 : i32, i32, i32
  }
  func.func @transform_1(%arg0: i32) -> (i32, i32) {
    %c0_i32 = arith.constant 0 : i32
    %c0_i32_0 = arith.constant 0 : i32
    %c0_i32_1 = arith.constant 0 : i32
    return %c0_i32, %c0_i32_0 : i32, i32
  }
  func.func @transform_2(%arg0: i32) -> (i32, i32) {
    %c0_i32 = arith.constant 0 : i32
    %c0_i32_0 = arith.constant 0 : i32
    %c0_i32_1 = arith.constant 0 : i32
    return %c0_i32, %c0_i32_0 : i32, i32
  }
  func.func @transform_3(%arg0: i32) -> (i32, i32) {
    %c0_i32 = arith.constant 0 : i32
    %c0_i32_0 = arith.constant 0 : i32
    %c0_i32_1 = arith.constant 0 : i32
    return %c0_i32, %c0_i32_0 : i32, i32
  }
  func.func @transform_4(%arg0: i32) -> (i32, i32) {
    %c0_i32 = arith.constant 0 : i32
    %c0_i32_0 = arith.constant 0 : i32
    %c0_i32_1 = arith.constant 0 : i32
    return %c0_i32, %c0_i32_0 : i32, i32
  }
  func.func @transform_5(%arg0: i32) -> (i32, i32) {
    %c0_i32 = arith.constant 0 : i32
    %c0_i32_0 = arith.constant 0 : i32
    %c0_i32_1 = arith.constant 0 : i32
    return %c0_i32, %c0_i32_0 : i32, i32
  }
  func.func @transform_6(%arg0: i32) -> (i32, i32) {
    %c0_i32 = arith.constant 0 : i32
    %c0_i32_0 = arith.constant 0 : i32
    %c0_i32_1 = arith.constant 0 : i32
    return %c0_i32, %c0_i32_0 : i32, i32
  }
  func.func @transform_7(%arg0: i32) -> (i32, i32, i32) {
    %c0_i32 = arith.constant 0 : i32
    %c0_i32_0 = arith.constant 0 : i32
    %c0_i32_1 = arith.constant 0 : i32
    return %arg0, %c0_i32, %c0_i32_0 : i32, i32, i32
  }
}

</mosaic_0001>

<llo_original>
// kernel: tpu_custom_call.1
$region0: #{tpu_custom_call.1}
  #allocation0 [shape = 'u32[]', space=smem, size = 0x4, offset = 0x4, fixed_abs, tag = 'smem constant byte address 0x4 - core index']
  #allocation1 [shape = 'u32[144,128]{1,0:T(1,128)}', space=vmem, size = 0x12000, scoped, tag = 'internal scratch']
  %s0 = inlined_call_operand.vmem [shape: f32[2,8,16], index: 0, kind: input, shape index: {}]
  %s1 = inlined_call_operand.vmem [shape: f32[64,64], index: 1, kind: input, shape index: {}]
  %s2 = inlined_call_operand.hbm [shape: f32[8,64], index: 2, kind: input, shape index: {}]
  %s3 = inlined_call_operand.vmem [shape: f32[16,64], index: 3, kind: input, shape index: {}]
  %s4 = inlined_call_operand.hbm [shape: f32[16,64], index: 4, kind: input, shape index: {}]
  %s5 = inlined_call_operand.vmem [shape: f32[64,32], index: 5, kind: input, shape index: {}]
  %s6 = inlined_call_operand.vmem [shape: f32[1,32], index: 6, kind: input, shape index: {}]
  %s7 = inlined_call_operand.hbm [shape: f32[2,8,32], index: 7, kind: output, shape index: {}]
  %s8 = sld [smem:[#allocation0]]
  $region69: #{tpu_custom_call.1} parent=0
    _
  %s10 = ssub.s32 1, %s8
  %s11 = scalar_select 0, %s10, %s8
  $region1: #{tpu_custom_call.1} parent=0
    #allocation2 [shape = 'u8[4096]{0}', space=vmem, size = 0x1000, scoped, tag = 'input window, operand 2, single buffered']
    #allocation3 [shape = 's32[2]{0}', space=sflag, size = 0x8, scoped, tag = 'scoped memory for tpu_custom_call.1']
    #allocation4 [shape = 's32[2]{0}', space=sflag, size = 0x8, scoped, tag = 'scoped memory for tpu_custom_call.1']
    #allocation5 [shape = 'u8[8192]{0}', space=vmem, size = 0x2000, scoped, tag = 'input window, operand 4, single buffered']
    #allocation6 [shape = 's32[1]{0}', space=sflag, size = 0x4, scoped, tag = 'scoped memory for tpu_custom_call.1']
    #allocation7 [shape = 'u8[8192]{0}', space=vmem, size = 0x2000, scoped, tag = 'output window, operand 0']
    %12 = vsyncpa [#allocation3], 0
    %13 = vsyncpa [#allocation6], 0
    %14 = vsyncpa [#allocation4], 0
    %s15 = scalar_lea.sflag [#allocation4], 1
    %16 = vsyncpa %s15, 0
    loop: start=0, step=1, limit=4
    $region2: #{tpu_custom_call.1} parent=1 // loop_pre_header
      _
    $region3: #{tpu_custom_call.1} parent=1 // loop_header
      %s18 = sphi 0, %s22
      %p19 = scmp.ge.s32.totalorder %s18, 4
      %s28 = sphi 0, %s30
      %s31 = sphi 0, %s28
      %s32 = sphi 0, %s31
      %s48 = sphi 0, %s32
      %s52 = sphi 0, %s52
      %s54 = sphi 0, %s52
      %s55 = sphi 0, %s54
      %s69 = sphi 0, %s55
      %s73 = sphi 0, %s73
      %s75 = sphi 0, %s73
      %s76 = sphi 0, %s75
      %s90 = sphi 0, %s76
      %s94 = sphi 0, %s94
      %s96 = sphi 0, %s94
      %s97 = sphi 0, %s96
      %s111 = sphi 0, %s97
      %s115 = sphi 0, %s115
      %s117 = sphi 0, %s115
      %s118 = sphi 0, %s117
      %s132 = sphi 0, %s118
      %s136 = sphi 0, %s136
      %s138 = sphi 0, %s136
      %s139 = sphi 0, %s138
      %s153 = sphi 0, %s139
      %s157 = sphi 0, %s157
      %s159 = sphi 0, %s157
      %s160 = sphi 0, %s159
      %s174 = sphi 0, %s160
      %s180 = sphi 0, %s182
      %s183 = sphi 0, %s180
      %s184 = sphi 0, %s183
      %s200 = sphi 0, %s184
    $region4: #{tpu_custom_call.1} parent=1 // loop_header_branch
      %21 = sbr.rel (%p19) target = $region8
    $region5: #{tpu_custom_call.1} parent=1 // loop_body
      %s23 = ssub.s32 %s18, 1
      %s24 = ssub.s32 %s18, 2
      %s25 = sadd.s32 %s18, 1
      %s26 = ssub.s32 %s18, %s25
      %p27 = scmp.eq.s32.totalorder %s26, 0
      %s29 = sadd.s32 %s28, 1
      %s30 = scalar_select %p27, %s28, %s29
      %p33 = pneg %p27
      %p34 = scmp.eq.s32.totalorder %s18, 1
      %p35 = por %p33, %p34
      %p36 = scmp.ne.s32.totalorder %s28, %s31
      %p37 = scmp.eq.s32.totalorder %s18, 0
      %p38 = por %p36, %p37
      %p39 = scmp.ne.s32.totalorder %s28, %s31
      %p40 = scmp.eq.s32.totalorder %s23, 1
      %p41 = por %p39, %p40
      %p42 = scmp.ne.s32.totalorder %s31, %s32
      %p43 = scmp.eq.s32.totalorder %s23, 0
      %p44 = por %p42, %p43
      %p45 = scmp.ne.s32.totalorder %s31, %s32
      %p46 = scmp.eq.s32.totalorder %s24, 1
      %p47 = por %p45, %p46
      %p49 = scmp.ne.s32.totalorder %s32, %s48
      %p50 = scmp.eq.s32.totalorder %s24, 0
      %p51 = por %p49, %p50
      %s53 = sadd.s32 %s52, 1
      %p56 = scmp.eq.s32.totalorder %s18, 1
      %p57 = scmp.ne.s32.totalorder %s52, %s54
      %p58 = scmp.eq.s32.totalorder %s18, 0
      %p59 = por %p57, %p58
      %p60 = scmp.ne.s32.totalorder %s52, %s54
      %p61 = scmp.eq.s32.totalorder %s23, 1
      %p62 = por %p60, %p61
      %p63 = scmp.ne.s32.totalorder %s54, %s55
      %p64 = scmp.eq.s32.totalorder %s23, 0
      %p65 = por %p63, %p64
      %p66 = scmp.ne.s32.totalorder %s54, %s55
      %p67 = scmp.eq.s32.totalorder %s24, 1
      %p68 = por %p66, %p67
      %p70 = scmp.ne.s32.totalorder %s55, %s69
      %p71 = scmp.eq.s32.totalorder %s24, 0
      %p72 = por %p70, %p71
      %s74 = sadd.s32 %s73, 1
      %p77 = scmp.eq.s32.totalorder %s18, 1
      %p78 = scmp.ne.s32.totalorder %s73, %s75
      %p79 = scmp.eq.s32.totalorder %s18, 0
      %p80 = por %p78, %p79
      %p81 = scmp.ne.s32.totalorder %s73, %s75
      %p82 = scmp.eq.s32.totalorder %s23, 1
      %p83 = por %p81, %p82
      %p84 = scmp.ne.s32.totalorder %s75, %s76
      %p85 = scmp.eq.s32.totalorder %s23, 0
      %p86 = por %p84, %p85
      %p87 = scmp.ne.s32.totalorder %s75, %s76
      %p88 = scmp.eq.s32.totalorder %s24, 1
      %p89 = por %p87, %p88
      %p91 = scmp.ne.s32.totalorder %s76, %s90
      %p92 = scmp.eq.s32.totalorder %s24, 0
      %p93 = por %p91, %p92
      %s95 = sadd.s32 %s94, 1
      %p98 = scmp.eq.s32.totalorder %s18, 1
      %p99 = scmp.ne.s32.totalorder %s94, %s96
      %p100 = scmp.eq.s32.totalorder %s18, 0
      %p101 = por %p99, %p100
      %p102 = scmp.ne.s32.totalorder %s94, %s96
      %p103 = scmp.eq.s32.totalorder %s23, 1
      %p104 = por %p102, %p103
      %p105 = scmp.ne.s32.totalorder %s96, %s97
      %p106 = scmp.eq.s32.totalorder %s23, 0
      %p107 = por %p105, %p106
      %p108 = scmp.ne.s32.totalorder %s96, %s97
      %p109 = scmp.eq.s32.totalorder %s24, 1
      %p110 = por %p108, %p109
      %p112 = scmp.ne.s32.totalorder %s97, %s111
      %p113 = scmp.eq.s32.totalorder %s24, 0
      %p114 = por %p112, %p113
      %s116 = sadd.s32 %s115, 1
      %p119 = scmp.eq.s32.totalorder %s18, 1
      %p120 = scmp.ne.s32.totalorder %s115, %s117
      %p121 = scmp.eq.s32.totalorder %s18, 0
      %p122 = por %p120, %p121
      %p123 = scmp.ne.s32.totalorder %s115, %s117
      %p124 = scmp.eq.s32.totalorder %s23, 1
      %p125 = por %p123, %p124
      %p126 = scmp.ne.s32.totalorder %s117, %s118
      %p127 = scmp.eq.s32.totalorder %s23, 0
      %p128 = por %p126, %p127
      %p129 = scmp.ne.s32.totalorder %s117, %s118
      %p130 = scmp.eq.s32.totalorder %s24, 1
      %p131 = por %p129, %p130
      %p133 = scmp.ne.s32.totalorder %s118, %s132
      %p134 = scmp.eq.s32.totalorder %s24, 0
      %p135 = por %p133, %p134
      %s137 = sadd.s32 %s136, 1
      %p140 = scmp.eq.s32.totalorder %s18, 1
      %p141 = scmp.ne.s32.totalorder %s136, %s138
      %p142 = scmp.eq.s32.totalorder %s18, 0
      %p143 = por %p141, %p142
      %p144 = scmp.ne.s32.totalorder %s136, %s138
      %p145 = scmp.eq.s32.totalorder %s23, 1
      %p146 = por %p144, %p145
      %p147 = scmp.ne.s32.totalorder %s138, %s139
      %p148 = scmp.eq.s32.totalorder %s23, 0
      %p149 = por %p147, %p148
      %p150 = scmp.ne.s32.totalorder %s138, %s139
      %p151 = scmp.eq.s32.totalorder %s24, 1
      %p152 = por %p150, %p151
      %p154 = scmp.ne.s32.totalorder %s139, %s153
      %p155 = scmp.eq.s32.totalorder %s24, 0
      %p156 = por %p154, %p155
      %s158 = sadd.s32 %s157, 1
      %p161 = scmp.eq.s32.totalorder %s18, 1
      %p162 = scmp.ne.s32.totalorder %s157, %s159
      %p163 = scmp.eq.s32.totalorder %s18, 0
      %p164 = por %p162, %p163
      %p165 = scmp.ne.s32.totalorder %s157, %s159
      %p166 = scmp.eq.s32.totalorder %s23, 1
      %p167 = por %p165, %p166
      %p168 = scmp.ne.s32.totalorder %s159, %s160
      %p169 = scmp.eq.s32.totalorder %s23, 0
      %p170 = por %p168, %p169
      %p171 = scmp.ne.s32.totalorder %s159, %s160
      %p172 = scmp.eq.s32.totalorder %s24, 1
      %p173 = por %p171, %p172
      %p175 = scmp.ne.s32.totalorder %s160, %s174
      %p176 = scmp.eq.s32.totalorder %s24, 0
      %p177 = por %p175, %p176
      %s178 = ssub.s32 %s18, %s25
      %p179 = scmp.eq.s32.totalorder %s178, 0
      %s181 = sadd.s32 %s180, 1
      %s182 = scalar_select %p179, %s180, %s181
      %p185 = pneg %p179
      %p186 = scmp.eq.s32.totalorder %s18, 1
      %p187 = por %p185, %p186
      %p188 = scmp.ne.s32.totalorder %s180, %s183
      %p189 = scmp.eq.s32.totalorder %s18, 0
      %p190 = por %p188, %p189
      %p191 = scmp.ne.s32.totalorder %s180, %s183
      %p192 = scmp.eq.s32.totalorder %s23, 1
      %p193 = por %p191, %p192
      %p194 = scmp.ne.s32.totalorder %s183, %s184
      %p195 = scmp.eq.s32.totalorder %s23, 0
      %p196 = por %p194, %p195
      %p197 = scmp.ne.s32.totalorder %s183, %s184
      %p198 = scmp.eq.s32.totalorder %s24, 1
      %p199 = por %p197, %p198
      %p201 = scmp.ne.s32.totalorder %s184, %s200
      %p202 = scmp.eq.s32.totalorder %s24, 0
      %p203 = por %p201, %p202
      %p204 = scmp.le.s32.totalorder 1, %s18
      %p205 = scmp.lt.s32.totalorder %s18, 3
      %p206 = pnand %p204, %p205
      %p207 = pneg %p206
      // Predicated region
      $region9: #{tpu_custom_call.1} parent=5 // pred_check
        _
      $region10: #{tpu_custom_call.1} parent=5 // pred_check_branch
        %209 = sbr.rel (%p206) target = $region12
      $region11: #{tpu_custom_call.1} parent=5 // pred_region
        %s210 = ssub.s32 %s18, 1
        // Predicated region
        $region13: #{tpu_custom_call.1} parent=11 // pred_check
          %p211 = pneg %p65
        $region14: #{tpu_custom_call.1} parent=11 // pred_check_branch
          %213 = sbr.rel (%p211) target = $region16
        $region15: #{tpu_custom_call.1} parent=11 // pred_region
          _
        $region16: #{tpu_custom_call.1} parent=11 // pred_fallthru
          _
        // Predicated region
        $region17: #{tpu_custom_call.1} parent=11 // pred_check
          %p214 = pneg %p86
        $region18: #{tpu_custom_call.1} parent=11 // pred_check_branch
          %216 = sbr.rel (%p214) target = $region20
        $region19: #{tpu_custom_call.1} parent=11 // pred_region
          %s218 = ssub.s32 128, 128
          %219 = vsyncadd [#allocation3], %s218
          %s221 = sshll.u32 [#allocation2], 4
          %s222 = int_to_ptr.vmem [resolvable:$true] %s221
          %224 = dma.hbm_to_vmem [thread:$0]  %s2, 128, %s222, [#allocation3]
        $region20: #{tpu_custom_call.1} parent=11 // pred_fallthru
          _
        // Predicated region
        $region21: #{tpu_custom_call.1} parent=11 // pred_check
          %p225 = pneg %p107
        $region22: #{tpu_custom_call.1} parent=11 // pred_check_branch
          %227 = sbr.rel (%p225) target = $region24
        $region23: #{tpu_custom_call.1} parent=11 // pred_region
          _
        $region24: #{tpu_custom_call.1} parent=11 // pred_fallthru
          _
        // Predicated region
        $region25: #{tpu_custom_call.1} parent=11 // pred_check
          %p228 = pneg %p128
        $region26: #{tpu_custom_call.1} parent=11 // pred_check_branch
          %230 = sbr.rel (%p228) target = $region28
        $region27: #{tpu_custom_call.1} parent=11 // pred_region
          %s232 = ssub.s32 256, 256
          %233 = vsyncadd [#allocation6], %s232
          %s234 = sshll.u32 [#allocation5], 4
          %s235 = int_to_ptr.vmem [resolvable:$true] %s234
          %240 = dma.hbm_to_vmem [thread:$0]  %s4, 256, %s235, [#allocation6], 128, 128, 8
        $region28: #{tpu_custom_call.1} parent=11 // pred_fallthru
          _
        // Predicated region
        $region29: #{tpu_custom_call.1} parent=11 // pred_check
          %p241 = pneg %p149
        $region30: #{tpu_custom_call.1} parent=11 // pred_check_branch
          %243 = sbr.rel (%p241) target = $region32
        $region31: #{tpu_custom_call.1} parent=11 // pred_region
          _
        $region32: #{tpu_custom_call.1} parent=11 // pred_fallthru
          _
        // Predicated region
        $region33: #{tpu_custom_call.1} parent=11 // pred_check
          %p244 = pneg %p170
        $region34: #{tpu_custom_call.1} parent=11 // pred_check_branch
          %246 = sbr.rel (%p244) target = $region36
        $region35: #{tpu_custom_call.1} parent=11 // pred_region
          _
        $region36: #{tpu_custom_call.1} parent=11 // pred_fallthru
          _
      $region12: #{tpu_custom_call.1} parent=5 // pred_fallthru
        _
      %p247 = scmp.lt.s32.totalorder %s18, 2
      // Predicated region
      $region37: #{tpu_custom_call.1} parent=5 // pred_check
        %p248 = pneg %p247
      $region38: #{tpu_custom_call.1} parent=5 // pred_check_branch
        %250 = sbr.rel (%p248) target = $region40
      $region39: #{tpu_custom_call.1} parent=5 // pred_region
        // Predicated region
        $region41: #{tpu_custom_call.1} parent=39 // pred_check
          %p251 = pneg %p38
        $region42: #{tpu_custom_call.1} parent=39 // pred_check_branch
          %253 = sbr.rel (%p251) target = $region44
        $region43: #{tpu_custom_call.1} parent=39 // pred_region
          %p254 = scmp.lt.s32.totalorder %s18, 1
          %s255 = scalar_select %p254, %s18, 1
          %s256 = smul.addr %s255, 8
          %s257 = scalar_lea.vmem %s0, %s256
        $region44: #{tpu_custom_call.1} parent=39 // pred_fallthru
          _
      $region40: #{tpu_custom_call.1} parent=5 // pred_fallthru
        _
      %p258 = scmp.le.s32.totalorder 1, %s18
      %p259 = scmp.lt.s32.totalorder %s18, 3
      %p260 = pnand %p258, %p259
      %p261 = pneg %p260
      // Predicated region
      $region45: #{tpu_custom_call.1} parent=5 // pred_check
        _
      $region46: #{tpu_custom_call.1} parent=5 // pred_check_branch
        %263 = sbr.rel (%p260) target = $region48
      $region47: #{tpu_custom_call.1} parent=5 // pred_region
        %s264 = ssub.s32 %s18, 1
        // Predicated region
        $region49: #{tpu_custom_call.1} parent=47 // pred_check
          %p265 = pneg %p86
        $region50: #{tpu_custom_call.1} parent=47 // pred_check_branch
          %267 = sbr.rel (%p265) target = $region52
        $region51: #{tpu_custom_call.1} parent=47 // pred_region
          %268 = dma.done [#allocation3], 128
        $region52: #{tpu_custom_call.1} parent=47 // pred_fallthru
          _
        // Predicated region
        $region53: #{tpu_custom_call.1} parent=47 // pred_check
          %p269 = pneg %p128
        $region54: #{tpu_custom_call.1} parent=47 // pred_check_branch
          %271 = sbr.rel (%p269) target = $region56
        $region55: #{tpu_custom_call.1} parent=47 // pred_region
          %272 = dma.done [#allocation6], 256
        $region56: #{tpu_custom_call.1} parent=47 // pred_fallthru
          _
        %p273 = scmp.lt.s32.totalorder %s23, 1
        %s274 = scalar_select %p273, %s23, 1
        %s275 = smul.addr %s274, 8
        %s276 = scalar_lea.vmem %s0, %s275
        %p277 = pneg %p44
        %p278 = pneg %p41
        %p279 = pneg %p65
        %p280 = pneg %p62
        %p281 = pneg %p86
        %p282 = pneg %p83
        %p283 = pneg %p107
        %p284 = pneg %p104
        %p285 = pneg %p128
        %p286 = pneg %p125
        %p287 = pneg %p149
        %p288 = pneg %p146
        %p289 = pneg %p170
        %p290 = pneg %p167
        %p291 = pneg %p196
        %p292 = pneg %p193
        %s293 = sand.u32 %s183, 1
        %s294 = scalar_lea.sflag [#allocation4], %s293
        %s295 = sand.u32 %s183, 1
        %s296 = smul.addr %s295, 8
        %s297 = scalar_lea.vmem [#allocation7], %s296
        %p298 = scmp.lt.s32.totalorder %s23, 1
        %s299 = scalar_select %p298, %s23, 1
        %s300 = smul.addr %s299, 8
        %s301 = scalar_lea.vmem %s0, %s300
        %v302 = vld [vmem:[%s301] sm:$0xff]
        %v303 = vld [vmem:[%s3] sm:$0xff]
        %v304 = vld [vmem:[%s3 + $0x8] sm:$0xff]
        %vm305 = vcmask 130048
        %v307 = vsel %vm305, %v302, 0
        %309 = vmatprep.subr.mxu0 0.0
        %310 = vmatpush1.msra.mxu0 %v303
        %311 = vmatprep.subr.mxu0 0.0
        %312 = vmatpush1.msra.mxu0 %v304
        %313 = vmatprep.subr.mxu0 0.0
        %314 = vmatpush1.msra.mxu0 0.0
        %315 = vmatprep.subr.mxu0 0.0
        %316 = vmatpush1.msra.mxu0 0.0
        %317 = vmatprep.subr.mxu0 0.0
        %318 = vmatpush1.msra.mxu0 0.0
        %319 = vmatprep.subr.mxu0 0.0
        %320 = vmatpush1.msra.mxu0 0.0
        %321 = vmatprep.subr.mxu0 0.0
        %322 = vmatpush1.msra.mxu0 0.0
        %323 = vmatprep.subr.mxu0 0.0
        %324 = vmatpush1.msra.mxu0 0.0
        %325 = vmatprep.subr.mxu0 0.0
        %326 = vmatpush1.msra.mxu0 0.0
        %327 = vmatprep.subr.mxu0 0.0
        %328 = vmatpush1.msra.mxu0 0.0
        %329 = vmatprep.subr.mxu0 0.0
        %330 = vmatpush1.msra.mxu0 0.0
        %331 = vmatprep.subr.mxu0 0.0
        %332 = vmatpush1.msra.mxu0 0.0
        %333 = vmatprep.subr.mxu0 0.0
        %334 = vmatpush1.msra.mxu0 0.0
        %335 = vmatprep.subr.mxu0 0.0
        %336 = vmatpush1.msra.mxu0 0.0
        %337 = vmatprep.subr.mxu0 0.0
        %338 = vmatpush1.msra.mxu0 0.0
        %339 = vmatprep.subr.mxu0 0.0
        %340 = vmatpush1.msra.mxu0 0.0
        %341 = vmatprep.subr.mxu0 0.0
        %342 = vmatpush1.msra.mxu0 0.0
        %343 = vmatprep.subr.mxu0 0.0
        %344 = vmatpush1.msra.mxu0 0.0
        %345 = vmatprep.subr.mxu0 0.0
        %346 = vmatpush1.msra.mxu0 0.0
        %347 = vmatprep.subr.mxu0 0.0
        %348 = vmatpush1.msra.mxu0 0.0
        %349 = vmatprep.subr.mxu0 0.0
        %350 = vmatpush1.msra.mxu0 0.0
        %351 = vmatprep.subr.mxu0 0.0
        %352 = vmatpush1.msra.mxu0 0.0
        %353 = vmatprep.subr.mxu0 0.0
        %354 = vmatpush1.msra.mxu0 0.0
        %355 = vmatprep.subr.mxu0 0.0
        %356 = vmatpush1.msra.mxu0 0.0
        %357 = vmatprep.subr.mxu0 0.0
        %358 = vmatpush1.msra.mxu0 0.0
        %359 = vmatprep.subr.mxu0 0.0
        %360 = vmatpush1.msra.mxu0 0.0
        %361 = vmatprep.subr.mxu0 0.0
        %362 = vmatpush1.msra.mxu0 0.0
        %363 = vmatprep.subr.mxu0 0.0
        %364 = vmatpush1.msra.mxu0 0.0
        %365 = vmatprep.subr.mxu0 0.0
        %366 = vmatpush1.msra.mxu0 0.0
        %367 = vmatprep.subr.mxu0 0.0
        %368 = vmatpush1.msra.mxu0 0.0
        %369 = vmatprep.subr.mxu0 0.0
        %370 = vmatpush1.msra.mxu0 0.0
        %371 = vmatprep.subr.mxu0 0.0
        %372 = vmatpush1.msra.mxu0 0.0
        %373 = vmatprep.mubr.f32.mxu0 0.0
        %374 = vmatmul.mubr.f32.gmra.mrb[0].mxu0 %v307
        %v375 = vpop.f32.mrb[0].mxu0
        %v376 = vadd.f32 0.0, %v375
        %v377 = vpop.f32.mrb[0].mxu0
        %378 = vdwg.mxu0
        %v379 = vld [vmem:[#allocation5] sm:$0xff]
        %v380 = vld [vmem:[#allocation5 + $0x8] sm:$0xff]
        %381 = vmatprep.subr.mxu0 0.0
        %382 = vmatpush1.msra.mxu0 %v379
        %383 = vmatprep.subr.mxu0 0.0
        %384 = vmatpush1.msra.mxu0 %v380
        %385 = vmatprep.subr.mxu0 0.0
        %386 = vmatpush1.msra.mxu0 0.0
        %387 = vmatprep.subr.mxu0 0.0
        %388 = vmatpush1.msra.mxu0 0.0
        %389 = vmatprep.subr.mxu0 0.0
        %390 = vmatpush1.msra.mxu0 0.0
        %391 = vmatprep.subr.mxu0 0.0
        %392 = vmatpush1.msra.mxu0 0.0
        %393 = vmatprep.subr.mxu0 0.0
        %394 = vmatpush1.msra.mxu0 0.0
        %395 = vmatprep.subr.mxu0 0.0
        %396 = vmatpush1.msra.mxu0 0.0
        %397 = vmatprep.subr.mxu0 0.0
        %398 = vmatpush1.msra.mxu0 0.0
        %399 = vmatprep.subr.mxu0 0.0
        %400 = vmatpush1.msra.mxu0 0.0
        %401 = vmatprep.subr.mxu0 0.0
        %402 = vmatpush1.msra.mxu0 0.0
        %403 = vmatprep.subr.mxu0 0.0
        %404 = vmatpush1.msra.mxu0 0.0
        %405 = vmatprep.subr.mxu0 0.0
        %406 = vmatpush1.msra.mxu0 0.0
        %407 = vmatprep.subr.mxu0 0.0
        %408 = vmatpush1.msra.mxu0 0.0
        %409 = vmatprep.subr.mxu0 0.0
        %410 = vmatpush1.msra.mxu0 0.0
        %411 = vmatprep.subr.mxu0 0.0
        %412 = vmatpush1.msra.mxu0 0.0
        %413 = vmatprep.subr.mxu0 0.0
        %414 = vmatpush1.msra.mxu0 0.0
        %415 = vmatprep.subr.mxu0 0.0
        %416 = vmatpush1.msra.mxu0 0.0
        %417 = vmatprep.subr.mxu0 0.0
        %418 = vmatpush1.msra.mxu0 0.0
        %419 = vmatprep.subr.mxu0 0.0
        %420 = vmatpush1.msra.mxu0 0.0
        %421 = vmatprep.subr.mxu0 0.0
        %422 = vmatpush1.msra.mxu0 0.0
        %423 = vmatprep.subr.mxu0 0.0
        %424 = vmatpush1.msra.mxu0 0.0
        %425 = vmatprep.subr.mxu0 0.0
        %426 = vmatpush1.msra.mxu0 0.0
        %427 = vmatprep.subr.mxu0 0.0
        %428 = vmatpush1.msra.mxu0 0.0
        %429 = vmatprep.subr.mxu0 0.0
        %430 = vmatpush1.msra.mxu0 0.0
        %431 = vmatprep.subr.mxu0 0.0
        %432 = vmatpush1.msra.mxu0 0.0
        %433 = vmatprep.subr.mxu0 0.0
        %434 = vmatpush1.msra.mxu0 0.0
        %435 = vmatprep.subr.mxu0 0.0
        %436 = vmatpush1.msra.mxu0 0.0
        %437 = vmatprep.subr.mxu0 0.0
        %438 = vmatpush1.msra.mxu0 0.0
        %439 = vmatprep.subr.mxu0 0.0
        %440 = vmatpush1.msra.mxu0 0.0
        %441 = vmatprep.subr.mxu0 0.0
        %442 = vmatpush1.msra.mxu0 0.0
        %443 = vmatprep.subr.mxu0 0.0
        %444 = vmatpush1.msra.mxu0 0.0
        %445 = vmatprep.mubr.f32.mxu0 0.0
        %446 = vmatmul.mubr.f32.gmra.mrb[0].mxu0 %v307
        %v447 = vpop.f32.mrb[0].mxu0
        %v448 = vadd.f32 0.0, %v447
        %v449 = vpop.f32.mrb[0].mxu0
        %450 = vdwg.mxu0
        %v451 = vld [vmem:[%s1] sm:$0xff]
        %v452 = vld [vmem:[%s1 + $0x8] sm:$0xff]
        %v453 = vld [vmem:[%s1 + $0x10] sm:$0xff]
        %v454 = vld [vmem:[%s1 + $0x18] sm:$0xff]
        %v455 = vld [vmem:[%s1 + $0x20] sm:$0xff]
        %v456 = vld [vmem:[%s1 + $0x28] sm:$0xff]
        %v457 = vld [vmem:[%s1 + $0x30] sm:$0xff]
        %v458 = vld [vmem:[%s1 + $0x38] sm:$0xff]
        %vm459 = vcmask 523264
        %v461 = vsel %vm459, %v376, 0
        %463 = vmatprep.subr.mxu0 0.0
        %464 = vmatpush1.msra.mxu0 %v451
        %465 = vmatprep.subr.mxu0 0.0
        %466 = vmatpush1.msra.mxu0 %v452
        %467 = vmatprep.subr.mxu0 0.0
        %468 = vmatpush1.msra.mxu0 %v453
        %469 = vmatprep.subr.mxu0 0.0
        %470 = vmatpush1.msra.mxu0 %v454
        %471 = vmatprep.subr.mxu0 0.0
        %472 = vmatpush1.msra.mxu0 %v455
        %473 = vmatprep.subr.mxu0 0.0
        %474 = vmatpush1.msra.mxu0 %v456
        %475 = vmatprep.subr.mxu0 0.0
        %476 = vmatpush1.msra.mxu0 %v457
        %477 = vmatprep.subr.mxu0 0.0
        %478 = vmatpush1.msra.mxu0 %v458
        %479 = vmatprep.subr.mxu0 0.0
        %480 = vmatpush1.msra.mxu0 0.0
        %481 = vmatprep.subr.mxu0 0.0
        %482 = vmatpush1.msra.mxu0 0.0
        %483 = vmatprep.subr.mxu0 0.0
        %484 = vmatpush1.msra.mxu0 0.0
        %485 = vmatprep.subr.mxu0 0.0
        %486 = vmatpush1.msra.mxu0 0.0
        %487 = vmatprep.subr.mxu0 0.0
        %488 = vmatpush1.msra.mxu0 0.0
        %489 = vmatprep.subr.mxu0 0.0
        %490 = vmatpush1.msra.mxu0 0.0
        %491 = vmatprep.subr.mxu0 0.0
        %492 = vmatpush1.msra.mxu0 0.0
        %493 = vmatprep.subr.mxu0 0.0
        %494 = vmatpush1.msra.mxu0 0.0
        %495 = vmatprep.subr.mxu0 0.0
        %496 = vmatpush1.msra.mxu0 0.0
        %497 = vmatprep.subr.mxu0 0.0
        %498 = vmatpush1.msra.mxu0 0.0
        %499 = vmatprep.subr.mxu0 0.0
        %500 = vmatpush1.msra.mxu0 0.0
        %501 = vmatprep.subr.mxu0 0.0
        %502 = vmatpush1.msra.mxu0 0.0
        %503 = vmatprep.subr.mxu0 0.0
        %504 = vmatpush1.msra.mxu0 0.0
        %505 = vmatprep.subr.mxu0 0.0
        %506 = vmatpush1.msra.mxu0 0.0
        %507 = vmatprep.subr.mxu0 0.0
        %508 = vmatpush1.msra.mxu0 0.0
        %509 = vmatprep.subr.mxu0 0.0
        %510 = vmatpush1.msra.mxu0 0.0
        %511 = vmatprep.subr.mxu0 0.0
        %512 = vmatpush1.msra.mxu0 0.0
        %513 = vmatprep.subr.mxu0 0.0
        %514 = vmatpush1.msra.mxu0 0.0
        %515 = vmatprep.subr.mxu0 0.0
        %516 = vmatpush1.msra.mxu0 0.0
        %517 = vmatprep.subr.mxu0 0.0
        %518 = vmatpush1.msra.mxu0 0.0
        %519 = vmatprep.subr.mxu0 0.0
        %520 = vmatpush1.msra.mxu0 0.0
        %521 = vmatprep.subr.mxu0 0.0
        %522 = vmatpush1.msra.mxu0 0.0
        %523 = vmatprep.subr.mxu0 0.0
        %524 = vmatpush1.msra.mxu0 0.0
        %525 = vmatprep.subr.mxu0 0.0
        %526 = vmatpush1.msra.mxu0 0.0
        %527 = vmatprep.mubr.f32.mxu0 0.0
        %528 = vmatmul.mubr.f32.gmra.mrb[0].mxu0 %v461
        %v529 = vpop.f32.mrb[0].mxu0
        %v530 = vadd.f32 0.0, %v529
        %v531 = vpop.f32.mrb[0].mxu0
        %532 = vdwg.mxu0
        %533 = vxpose.xlu0.b32.start [1/16] %v530, 128
        %534 = vxpose.xlu0.b32.cont [2/16] 0.0, 128
        %535 = vxpose.xlu0.b32.cont [3/16] 0.0, 128
        %536 = vxpose.xlu0.b32.cont [4/16] 0.0, 128
        %537 = vxpose.xlu0.b32.cont [5/16] 0.0, 128
        %538 = vxpose.xlu0.b32.cont [6/16] 0.0, 128
        %539 = vxpose.xlu0.b32.cont [7/16] 0.0, 128
        %540 = vxpose.xlu0.b32.cont [8/16] 0.0, 128
        %541 = vxpose.xlu0.b32.cont [9/16] 0.0, 128
        %542 = vxpose.xlu0.b32.cont [10/16] 0.0, 128
        %543 = vxpose.xlu0.b32.cont [11/16] 0.0, 128
        %544 = vxpose.xlu0.b32.cont [12/16] 0.0, 128
        %545 = vxpose.xlu0.b32.cont [13/16] 0.0, 128
        %546 = vxpose.xlu0.b32.cont [14/16] 0.0, 128
        %547 = vxpose.xlu0.b32.cont [15/16] 0.0, 128
        %548 = vxpose.xlu0.b32.end [16/16] 0.0, 128
        %v549 = vpop.trf.xlu0
        %v550 = vpop.trf.xlu0
        %v551 = vpop.trf.xlu0
        %v552 = vpop.trf.xlu0
        %v553 = vpop.trf.xlu0
        %v554 = vpop.trf.xlu0
        %v555 = vpop.trf.xlu0
        %v556 = vpop.trf.xlu0
        %v557 = vpop.trf.xlu0
        %v558 = vpop.trf.xlu0
        %v559 = vpop.trf.xlu0
        %v560 = vpop.trf.xlu0
        %v561 = vpop.trf.xlu0
        %v562 = vpop.trf.xlu0
        %v563 = vpop.trf.xlu0
        %v564 = vpop.trf.xlu0
        %vm565 = vcmask 64512
        %v566 = vsel %vm565, %v549, -inf
        %567 = vmax.xlane.f32.xlu0 %v566
        %v568 = vpop.xlane.xlu0 %567
        %v569 = vsel %vm565, %v550, -inf
        %570 = vmax.xlane.f32.xlu0 %v569
        %v571 = vpop.xlane.xlu0 %570
        %v572 = vsel %vm565, %v551, -inf
        %573 = vmax.xlane.f32.xlu0 %v572
        %v574 = vpop.xlane.xlu0 %573
        %v575 = vsel %vm565, %v552, -inf
        %576 = vmax.xlane.f32.xlu0 %v575
        %v577 = vpop.xlane.xlu0 %576
        %v578 = vsel %vm565, %v553, -inf
        %579 = vmax.xlane.f32.xlu0 %v578
        %v580 = vpop.xlane.xlu0 %579
        %v581 = vsel %vm565, %v554, -inf
        %582 = vmax.xlane.f32.xlu0 %v581
        %v583 = vpop.xlane.xlu0 %582
        %v584 = vsel %vm565, %v555, -inf
        %585 = vmax.xlane.f32.xlu0 %v584
        %v586 = vpop.xlane.xlu0 %585
        %v587 = vsel %vm565, %v556, -inf
        %588 = vmax.xlane.f32.xlu0 %v587
        %v589 = vpop.xlane.xlu0 %588
        %v590 = vsub.f32 %v549, %v568
        %v591 = vsub.f32 %v550, %v571
        %v592 = vsub.f32 %v551, %v574
        %v593 = vsub.f32 %v552, %v577
        %v594 = vsub.f32 %v553, %v580
        %v595 = vsub.f32 %v554, %v583
        %v596 = vsub.f32 %v555, %v586
        %v597 = vsub.f32 %v556, %v589
        %v598 = vmul.f32 %v590, 1.442695
        %v599 = vpow.pop %v598
        %v600 = vmul.f32 %v591, 1.442695
        %v601 = vpow.pop %v600
        %v602 = vmul.f32 %v592, 1.442695
        %v603 = vpow.pop %v602
        %v604 = vmul.f32 %v593, 1.442695
        %v605 = vpow.pop %v604
        %v606 = vmul.f32 %v594, 1.442695
        %v607 = vpow.pop %v606
        %v608 = vmul.f32 %v595, 1.442695
        %v609 = vpow.pop %v608
        %v610 = vmul.f32 %v596, 1.442695
        %v611 = vpow.pop %v610
        %v612 = vmul.f32 %v597, 1.442695
        %v613 = vpow.pop %v612
        %v614 = vsel %vm565, %v599, 0.0
        %615 = vadd.xlane.f32.xlu0 %v614
        %v616 = vpop.xlane.xlu0 %615
        %v617 = vsel %vm565, %v601, 0.0
        %618 = vadd.xlane.f32.xlu0 %v617
        %v619 = vpop.xlane.xlu0 %618
        %v620 = vsel %vm565, %v603, 0.0
        %621 = vadd.xlane.f32.xlu0 %v620
        %v622 = vpop.xlane.xlu0 %621
        %v623 = vsel %vm565, %v605, 0.0
        %624 = vadd.xlane.f32.xlu0 %v623
        %v625 = vpop.xlane.xlu0 %624
        %v626 = vsel %vm565, %v607, 0.0
        %627 = vadd.xlane.f32.xlu0 %v626
        %v628 = vpop.xlane.xlu0 %627
        %v629 = vsel %vm565, %v609, 0.0
        %630 = vadd.xlane.f32.xlu0 %v629
        %v631 = vpop.xlane.xlu0 %630
        %v632 = vsel %vm565, %v611, 0.0
        %633 = vadd.xlane.f32.xlu0 %v632
        %v634 = vpop.xlane.xlu0 %633
        %v635 = vsel %vm565, %v613, 0.0
        %636 = vadd.xlane.f32.xlu0 %v635
        %v637 = vpop.xlane.xlu0 %636
        %v638 = vrcp.pop %v616
        %v639 = vrcp.pop %v619
        %v640 = vrcp.pop %v622
        %v641 = vrcp.pop %v625
        %v642 = vrcp.pop %v628
        %v643 = vrcp.pop %v631
        %v644 = vrcp.pop %v634
        %v645 = vrcp.pop %v637
        %v646 = vmul.f32 %v599, %v638
        %v647 = vmul.f32 %v601, %v639
        %v648 = vmul.f32 %v603, %v640
        %v649 = vmul.f32 %v605, %v641
        %v650 = vmul.f32 %v607, %v642
        %v651 = vmul.f32 %v609, %v643
        %v652 = vmul.f32 %v611, %v644
        %v653 = vmul.f32 %v613, %v645
        %v655 = vsel %vm565, %v646, 0
        %v658 = vsel %vm565, %v647, 0
        %v661 = vsel %vm565, %v648, 0
        %v664 = vsel %vm565, %v649, 0
        %v667 = vsel %vm565, %v650, 0
        %v670 = vsel %vm565, %v651, 0
        %v673 = vsel %vm565, %v652, 0
        %v676 = vsel %vm565, %v653, 0
        %678 = vmatprep.subr.mxu0 0.0
        %679 = vmatpush1.msra.mxu0 %v448
        %680 = vmatprep.subr.mxu0 0.0
        %681 = vmatpush1.msra.mxu0 0.0
        %682 = vmatprep.subr.mxu0 0.0
        %683 = vmatpush1.msra.mxu0 0.0
        %684 = vmatprep.subr.mxu0 0.0
        %685 = vmatpush1.msra.mxu0 0.0
        %686 = vmatprep.subr.mxu0 0.0
        %687 = vmatpush1.msra.mxu0 0.0
        %688 = vmatprep.subr.mxu0 0.0
        %689 = vmatpush1.msra.mxu0 0.0
        %690 = vmatprep.subr.mxu0 0.0
        %691 = vmatpush1.msra.mxu0 0.0
        %692 = vmatprep.subr.mxu0 0.0
        %693 = vmatpush1.msra.mxu0 0.0
        %694 = vmatprep.subr.mxu0 0.0
        %695 = vmatpush1.msra.mxu0 0.0
        %696 = vmatprep.subr.mxu0 0.0
        %697 = vmatpush1.msra.mxu0 0.0
        %698 = vmatprep.subr.mxu0 0.0
        %699 = vmatpush1.msra.mxu0 0.0
        %700 = vmatprep.subr.mxu0 0.0
        %701 = vmatpush1.msra.mxu0 0.0
        %702 = vmatprep.subr.mxu0 0.0
        %703 = vmatpush1.msra.mxu0 0.0
        %704 = vmatprep.subr.mxu0 0.0
        %705 = vmatpush1.msra.mxu0 0.0
        %706 = vmatprep.subr.mxu0 0.0
        %707 = vmatpush1.msra.mxu0 0.0
        %708 = vmatprep.subr.mxu0 0.0
        %709 = vmatpush1.msra.mxu0 0.0
        %710 = vmatprep.subr.mxu0 0.0
        %711 = vmatpush1.msra.mxu0 0.0
        %712 = vmatprep.subr.mxu0 0.0
        %713 = vmatpush1.msra.mxu0 0.0
        %714 = vmatprep.subr.mxu0 0.0
        %715 = vmatpush1.msra.mxu0 0.0
        %716 = vmatprep.subr.mxu0 0.0
        %717 = vmatpush1.msra.mxu0 0.0
        %718 = vmatprep.subr.mxu0 0.0
        %719 = vmatpush1.msra.mxu0 0.0
        %720 = vmatprep.subr.mxu0 0.0
        %721 = vmatpush1.msra.mxu0 0.0
        %722 = vmatprep.subr.mxu0 0.0
        %723 = vmatpush1.msra.mxu0 0.0
        %724 = vmatprep.subr.mxu0 0.0
        %725 = vmatpush1.msra.mxu0 0.0
        %726 = vmatprep.subr.mxu0 0.0
        %727 = vmatpush1.msra.mxu0 0.0
        %728 = vmatprep.subr.mxu0 0.0
        %729 = vmatpush1.msra.mxu0 0.0
        %730 = vmatprep.subr.mxu0 0.0
        %731 = vmatpush1.msra.mxu0 0.0
        %732 = vmatprep.subr.mxu0 0.0
        %733 = vmatpush1.msra.mxu0 0.0
        %734 = vmatprep.subr.mxu0 0.0
        %735 = vmatpush1.msra.mxu0 0.0
        %736 = vmatprep.subr.mxu0 0.0
        %737 = vmatpush1.msra.mxu0 0.0
        %738 = vmatprep.subr.mxu0 0.0
        %739 = vmatpush1.msra.mxu0 0.0
        %740 = vmatprep.subr.mxu0 0.0
        %741 = vmatpush1.msra.mxu0 0.0
        %742 = vmatprep.mubr.f32.mxu0 0.0
        %743 = vmatmul.mubr.f32.gmra.mrb[0].mxu0 %v655
        %v744 = vpop.f32.mrb[0].mxu0
        %v745 = vadd.f32 0.0, %v744
        %v746 = vpop.f32.mrb[0].mxu0
        %747 = vmatprep.mubr.f32.mxu0 0.0
        %748 = vmatmul.mubr.f32.gmra.mrb[0].mxu0 %v658
        %v749 = vpop.f32.mrb[0].mxu0
        %v750 = vadd.f32 0.0, %v749
        %v751 = vpop.f32.mrb[0].mxu0
        %752 = vmatprep.mubr.f32.mxu0 0.0
        %753 = vmatmul.mubr.f32.gmra.mrb[0].mxu0 %v661
        %v754 = vpop.f32.mrb[0].mxu0
        %v755 = vadd.f32 0.0, %v754
        %v756 = vpop.f32.mrb[0].mxu0
        %757 = vmatprep.mubr.f32.mxu0 0.0
        %758 = vmatmul.mubr.f32.gmra.mrb[0].mxu0 %v664
        %v759 = vpop.f32.mrb[0].mxu0
        %v760 = vadd.f32 0.0, %v759
        %v761 = vpop.f32.mrb[0].mxu0
        %762 = vmatprep.mubr.f32.mxu0 0.0
        %763 = vmatmul.mubr.f32.gmra.mrb[0].mxu0 %v667
        %v764 = vpop.f32.mrb[0].mxu0
        %v765 = vadd.f32 0.0, %v764
        %v766 = vpop.f32.mrb[0].mxu0
        %767 = vmatprep.mubr.f32.mxu0 0.0
        %768 = vmatmul.mubr.f32.gmra.mrb[0].mxu0 %v670
        %v769 = vpop.f32.mrb[0].mxu0
        %v770 = vadd.f32 0.0, %v769
        %v771 = vpop.f32.mrb[0].mxu0
        %772 = vmatprep.mubr.f32.mxu0 0.0
        %773 = vmatmul.mubr.f32.gmra.mrb[0].mxu0 %v673
        %v774 = vpop.f32.mrb[0].mxu0
        %v775 = vadd.f32 0.0, %v774
        %v776 = vpop.f32.mrb[0].mxu0
        %777 = vmatprep.mubr.f32.mxu0 0.0
        %778 = vmatmul.mubr.f32.gmra.mrb[0].mxu0 %v676
        %v779 = vpop.f32.mrb[0].mxu0
        %v780 = vadd.f32 0.0, %v779
        %v781 = vpop.f32.mrb[0].mxu0
        %782 = vdwg.mxu0
        %v783 = vld [vmem:[#allocation2] sm:$0xff]
        %v785 = vcombine.high %v783, %v783
        %v787 = vunpack.c.l.s4 1966171168
        %v788 = vunpack.c.0.s8 %v787
        %v789 = vlaneseq
        %v790 = vshrl.u32 %v789, 7
        %v791 = vsub.s32 %v788, %v790
        %v792 = vrot.slane %v783, %v791
        %v794 = vunpack.c.l.s4 1966171168
        %v795 = vunpack.c.0.s8 %v794
        %v796 = vlaneseq
        %v797 = vshrl.u32 %v796, 7
        %v798 = vsub.s32 %v795, %v797
        %v799 = vrot.slane %v785, %v798
        %v800 = vcombine.high %v792, %v792
        %v801 = vcombine.high %v799, %v799
        %v803 = vunpack.c.l.s4 1966171168
        %v804 = vunpack.c.0.s8 %v803
        %v805 = vlaneseq
        %v806 = vshrl.u32 %v805, 7
        %v807 = vsub.s32 %v804, %v806
        %v808 = vrot.slane %v792, %v807
        %v810 = vunpack.c.l.s4 1966171168
        %v811 = vunpack.c.0.s8 %v810
        %v812 = vlaneseq
        %v813 = vshrl.u32 %v812, 7
        %v814 = vsub.s32 %v811, %v813
        %v815 = vrot.slane %v799, %v814
        %v817 = vunpack.c.l.s4 1966171168
        %v818 = vunpack.c.0.s8 %v817
        %v819 = vlaneseq
        %v820 = vshrl.u32 %v819, 7
        %v821 = vsub.s32 %v818, %v820
        %v822 = vrot.slane %v800, %v821
        %v824 = vunpack.c.l.s4 1966171168
        %v825 = vunpack.c.0.s8 %v824
        %v826 = vlaneseq
        %v827 = vshrl.u32 %v826, 7
        %v828 = vsub.s32 %v825, %v827
        %v829 = vrot.slane %v801, %v828
        %v830 = vcombine.high %v808, %v808
        %v831 = vcombine.high %v815, %v815
        %v832 = vcombine.high %v822, %v822
        %v833 = vcombine.high %v829, %v829
        %v834 = vlaneseq
        %v835 = vshrl.u32 %v834, 7
        %v836 = vsub.s32 0, %v835
        %v837 = vrot.slane %v808, %v836
        %v838 = vlaneseq
        %v839 = vshrl.u32 %v838, 7
        %v840 = vsub.s32 0, %v839
        %v841 = vrot.slane %v822, %v840
        %v842 = vlaneseq
        %v843 = vshrl.u32 %v842, 7
        %v844 = vsub.s32 0, %v843
        %v845 = vrot.slane %v830, %v844
        %v846 = vlaneseq
        %v847 = vshrl.u32 %v846, 7
        %v848 = vsub.s32 0, %v847
        %v849 = vrot.slane %v832, %v848
        %v850 = vlaneseq
        %v851 = vshrl.u32 %v850, 7
        %v852 = vsub.s32 0, %v851
        %v853 = vrot.slane %v815, %v852
        %v854 = vlaneseq
        %v855 = vshrl.u32 %v854, 7
        %v856 = vsub.s32 0, %v855
        %v857 = vrot.slane %v829, %v856
        %v858 = vlaneseq
        %v859 = vshrl.u32 %v858, 7
        %v860 = vsub.s32 0, %v859
        %v861 = vrot.slane %v831, %v860
        %v862 = vlaneseq
        %v863 = vshrl.u32 %v862, 7
        %v864 = vsub.s32 0, %v863
        %v865 = vrot.slane %v833, %v864
        %v874 = vmul.f32 %v745, %v837
        %v875 = vmul.f32 %v750, %v841
        %v876 = vmul.f32 %v755, %v845
        %v877 = vmul.f32 %v760, %v849
        %v878 = vmul.f32 %v765, %v853
        %v879 = vmul.f32 %v770, %v857
        %v880 = vmul.f32 %v775, %v861
        %v881 = vmul.f32 %v780, %v865
        %v882 = vsel %vm459, %v874, 0.0
        %v883 = vsel %vm459, %v875, 0.0
        %v884 = vadd.f32 %v882, %v883
        %v885 = vsel %vm459, %v876, 0.0
        %v886 = vadd.f32 %v884, %v885
        %v887 = vsel %vm459, %v877, 0.0
        %v888 = vadd.f32 %v886, %v887
        %v889 = vsel %vm459, %v878, 0.0
        %v890 = vadd.f32 %v888, %v889
        %v891 = vsel %vm459, %v879, 0.0
        %v892 = vadd.f32 %v890, %v891
        %v893 = vsel %vm459, %v880, 0.0
        %v894 = vadd.f32 %v892, %v893
        %v895 = vsel %vm459, %v881, 0.0
        %v896 = vadd.f32 %v894, %v895
        %v897 = vld [vmem:[%s5] sm:$0xff]
        %v898 = vld [vmem:[%s5 + $0x8] sm:$0xff]
        %v899 = vld [vmem:[%s5 + $0x10] sm:$0xff]
        %v900 = vld [vmem:[%s5 + $0x18] sm:$0xff]
        %v901 = vld [vmem:[%s5 + $0x20] sm:$0xff]
        %v902 = vld [vmem:[%s5 + $0x28] sm:$0xff]
        %v903 = vld [vmem:[%s5 + $0x30] sm:$0xff]
        %v904 = vld [vmem:[%s5 + $0x38] sm:$0xff]
        %v905 = vld [vmem:[%s6] sm:$0x1]
        %v907 = vlaneseq
        %v908 = vshrl.u32 %v907, 7
        %v909 = vsub.s32 0, %v908
        %v910 = vrot.slane %v905, %v909
        %v913 = vsel %vm459, %v896, 0
        %915 = vmatprep.subr.mxu0 0.0
        %916 = vmatpush1.msra.mxu0 %v897
        %917 = vmatprep.subr.mxu0 0.0
        %918 = vmatpush1.msra.mxu0 %v898
        %919 = vmatprep.subr.mxu0 0.0
        %920 = vmatpush1.msra.mxu0 %v899
        %921 = vmatprep.subr.mxu0 0.0
        %922 = vmatpush1.msra.mxu0 %v900
        %923 = vmatprep.subr.mxu0 0.0
        %924 = vmatpush1.msra.mxu0 %v901
        %925 = vmatprep.subr.mxu0 0.0
        %926 = vmatpush1.msra.mxu0 %v902
        %927 = vmatprep.subr.mxu0 0.0
        %928 = vmatpush1.msra.mxu0 %v903
        %929 = vmatprep.subr.mxu0 0.0
        %930 = vmatpush1.msra.mxu0 %v904
        %931 = vmatprep.subr.mxu0 0.0
        %932 = vmatpush1.msra.mxu0 0.0
        %933 = vmatprep.subr.mxu0 0.0
        %934 = vmatpush1.msra.mxu0 0.0
        %935 = vmatprep.subr.mxu0 0.0
        %936 = vmatpush1.msra.mxu0 0.0
        %937 = vmatprep.subr.mxu0 0.0
        %938 = vmatpush1.msra.mxu0 0.0
        %939 = vmatprep.subr.mxu0 0.0
        %940 = vmatpush1.msra.mxu0 0.0
        %941 = vmatprep.subr.mxu0 0.0
        %942 = vmatpush1.msra.mxu0 0.0
        %943 = vmatprep.subr.mxu0 0.0
        %944 = vmatpush1.msra.mxu0 0.0
        %945 = vmatprep.subr.mxu0 0.0
        %946 = vmatpush1.msra.mxu0 0.0
        %947 = vmatprep.subr.mxu0 0.0
        %948 = vmatpush1.msra.mxu0 0.0
        %949 = vmatprep.subr.mxu0 0.0
        %950 = vmatpush1.msra.mxu0 0.0
        %951 = vmatprep.subr.mxu0 0.0
        %952 = vmatpush1.msra.mxu0 0.0
        %953 = vmatprep.subr.mxu0 0.0
        %954 = vmatpush1.msra.mxu0 0.0
        %955 = vmatprep.subr.mxu0 0.0
        %956 = vmatpush1.msra.mxu0 0.0
        %957 = vmatprep.subr.mxu0 0.0
        %958 = vmatpush1.msra.mxu0 0.0
        %959 = vmatprep.subr.mxu0 0.0
        %960 = vmatpush1.msra.mxu0 0.0
        %961 = vmatprep.subr.mxu0 0.0
        %962 = vmatpush1.msra.mxu0 0.0
        %963 = vmatprep.subr.mxu0 0.0
        %964 = vmatpush1.msra.mxu0 0.0
        %965 = vmatprep.subr.mxu0 0.0
        %966 = vmatpush1.msra.mxu0 0.0
        %967 = vmatprep.subr.mxu0 0.0
        %968 = vmatpush1.msra.mxu0 0.0
        %969 = vmatprep.subr.mxu0 0.0
        %970 = vmatpush1.msra.mxu0 0.0
        %971 = vmatprep.subr.mxu0 0.0
        %972 = vmatpush1.msra.mxu0 0.0
        %973 = vmatprep.subr.mxu0 0.0
        %974 = vmatpush1.msra.mxu0 0.0
        %975 = vmatprep.subr.mxu0 0.0
        %976 = vmatpush1.msra.mxu0 0.0
        %977 = vmatprep.subr.mxu0 0.0
        %978 = vmatpush1.msra.mxu0 0.0
        %979 = vmatprep.mubr.f32.mxu0 0.0
        %980 = vmatmul.mubr.f32.gmra.mrb[0].mxu0 %v913
        %v981 = vpop.f32.mrb[0].mxu0
        %v982 = vadd.f32 %v910, %v981
        %v983 = vpop.f32.mrb[0].mxu0
        %984 = vdwg.mxu0
        %vm985 = vcmask 261120
        %986 = vst.msk [vmem:[%s297] sm:$0xff] %vm985, %v982
        %s987 = sand.u32 %s183, 1
        %s988 = scalar_lea.sflag [#allocation4], %s987
        %s989 = sand.u32 %s183, 1
        %s990 = smul.addr %s989, 8
        %s991 = scalar_lea.vmem [#allocation7], %s990
        // Predicated region
        $region57: #{tpu_custom_call.1} parent=47 // pred_check
          %p992 = pneg %p193
        $region58: #{tpu_custom_call.1} parent=47 // pred_check_branch
          %994 = sbr.rel (%p992) target = $region60
        $region59: #{tpu_custom_call.1} parent=47 // pred_region
          %s996 = ssub.s32 128, 128
          %997 = vsyncadd %s988, %s996
          %s998 = smul.addr %s23, 128
          %s999 = scalar_lea.hbm %s7, %s998
          %s1001 = sshll.u32 %s991, 4
          %s1002 = int_to_ptr.vmem [resolvable:$true] %s1001
          %1004 = dma.vmem_to_hbm [thread:$0]  %s1002, 128, %s999, %s988
        $region60: #{tpu_custom_call.1} parent=47 // pred_fallthru
          _
      $region48: #{tpu_custom_call.1} parent=5 // pred_fallthru
        _
      %p1005 = scmp.le.s32.totalorder 2, %s18
      // Predicated region
      $region61: #{tpu_custom_call.1} parent=5 // pred_check
        %p1006 = pneg %p1005
      $region62: #{tpu_custom_call.1} parent=5 // pred_check_branch
        %1008 = sbr.rel (%p1006) target = $region64
      $region63: #{tpu_custom_call.1} parent=5 // pred_region
        %s1009 = ssub.s32 %s18, 2
        // Predicated region
        $region65: #{tpu_custom_call.1} parent=63 // pred_check
          %p1010 = pneg %p199
        $region66: #{tpu_custom_call.1} parent=63 // pred_check_branch
          %1012 = sbr.rel (%p1010) target = $region68
        $region67: #{tpu_custom_call.1} parent=63 // pred_region
          %s1013 = sand.u32 %s184, 1
          %s1014 = scalar_lea.sflag [#allocation4], %s1013
          %s1015 = sand.u32 %s184, 1
          %s1016 = smul.addr %s1015, 8
          %s1017 = scalar_lea.vmem [#allocation7], %s1016
          %1018 = dma.done %s1014, 128
        $region68: #{tpu_custom_call.1} parent=63 // pred_fallthru
          _
      $region64: #{tpu_custom_call.1} parent=5 // pred_fallthru
        _
    $region6: #{tpu_custom_call.1} parent=1 // loop_footer
      %s22 = sadd.s32 1, %s18
    $region7: #{tpu_custom_call.1} parent=1 // loop_footer_branch
      %17 = sbr.rel target = $region3
    $region8: #{tpu_custom_call.1} parent=1 // loop_exit
      _
    %1019 = vsyncpa [#allocation3], 1
    %s1020 = scalar_lea.sflag [#allocation3], 1
    %1021 = vsyncpa %s1020, 1
    %1022 = vsyncpa [#allocation6], 1
    %1023 = vsyncpa [#allocation4], 1
    %s1024 = scalar_lea.sflag [#allocation4], 1
    %1025 = vsyncpa %s1024, 1

</llo_original>
